<compile_context>
chip_gen: v7x
topology: tpu7x:2x2x1
jax: 0.10.0
libtpu: 0.0.40
codegen_flags: <defaults>
</compile_context>

<pallas_src>
import functools

import jax
import jax.numpy as jnp
from jax.experimental import pallas as pl
from jax.experimental.pallas import tpu as pltpu

NUMBER_OF_INPUTS = 402   # 400 structure pixels + (x, y)
HIDDEN_LAYER = 64
NUMBER_OF_OUTPUTS = 5    # spaces.Discrete(5)


def mlp_kernel(x_ref, w1_ref, b1_ref, w2_ref, b2_ref, o_ref):
    # Cast x to bf16 in-kernel: the HBM stream stays a single f32 pass and the
    # cast rides on spare VPU slots (kernel is HBM-bound).
    x_bf = x_ref[...].astype(jnp.bfloat16)
    # output1 = tanh(x @ W1 + b1); bf16 operands, f32 MXU accumulation.
    h = jnp.dot(x_bf, w1_ref[...], preferred_element_type=jnp.float32)
    h = jnp.tanh(h + b1_ref[...])                 # b1 is (1, 64), broadcasts over rows
    # output2 = h @ W2 + b2; bf16 operands, f32 accumulation, bf16 store.
    out = jnp.dot(h.astype(jnp.bfloat16), w2_ref[...],
                  preferred_element_type=jnp.float32)
    o_ref[...] = (out + b2_ref[...]).astype(o_ref.dtype)


@functools.partial(jax.jit, static_argnames=("block_b", "vmem_limit_bytes"))
def neural_network_forward(x, w1, b1, w2, b2, *, block_b=4096,
                           vmem_limit_bytes=48 * 1024 * 1024):
    """x: [B, 402] f32. w1/w2: bf16 [in, out]. b1/b2: f32. Returns [B, 5] bf16 Q-values."""
    B, F = x.shape
    H = w1.shape[1]
    O = w2.shape[1]

    if B <= block_b:
        # Single block covering the whole (possibly tiny / odd) batch: full-dim
        # block shapes carry no (8,128) requirement and need no padding.
        tb = B
    else:
        # Multiple of 16 (bf16 sublane packing). The last (ragged) block is
        # masked by Pallas: OOB rows are never written back, no jnp.pad copy.
        tb = (block_b // 16) * 16

    grid = (pl.cdiv(B, tb),)

    out = pl.pallas_call(
        mlp_kernel,
        out_shape=jax.ShapeDtypeStruct((B, O), jnp.bfloat16),
        grid=grid,
        in_specs=[
            # x: tiled over batch, double-buffered / pipelined by Pallas.
            pl.BlockSpec((tb, F), lambda i: (i, 0)),
            # Weights / biases: constant block index -> VMEM-resident across steps.
            pl.BlockSpec((F, H), lambda i: (0, 0)),
            pl.BlockSpec((1, H), lambda i: (0, 0)),
            pl.BlockSpec((H, O), lambda i: (0, 0)),
            pl.BlockSpec((1, O), lambda i: (0, 0)),
        ],
        out_specs=pl.BlockSpec((tb, O), lambda i: (i, 0)),
        compiler_params=pltpu.CompilerParams(
            dimension_semantics=("parallel",),
            vmem_limit_bytes=vmem_limit_bytes,
        ),
    )(x, w1, b1, w2, b2)

    return out


def init_params(key):
    """PyTorch nn.Linear default init: U[-1/sqrt(fan_in), +1/sqrt(fan_in)].
    Weights stored as [in_features, out_features] (i.e. W^T), persistently in
    bf16; biases stay f32 (added after f32 accumulation)."""
    k1, k2, k3, k4 = jax.random.split(key, 4)
    bound1 = 1.0 / jnp.sqrt(jnp.float32(NUMBER_OF_INPUTS))
    bound2 = 1.0 / jnp.sqrt(jnp.float32(HIDDEN_LAYER))
    w1 = jax.random.uniform(k1, (NUMBER_OF_INPUTS, HIDDEN_LAYER),
                            jnp.float32, -bound1, bound1).astype(jnp.bfloat16)
    b1 = jax.random.uniform(k2, (1, HIDDEN_LAYER), jnp.float32, -bound1, bound1)
    w2 = jax.random.uniform(k3, (HIDDEN_LAYER, NUMBER_OF_OUTPUTS),
                            jnp.float32, -bound2, bound2).astype(jnp.bfloat16)
    b2 = jax.random.uniform(k4, (1, NUMBER_OF_OUTPUTS), jnp.float32, -bound2, bound2)
    return w1, b1, w2, b2


def _ref_forward(x, w1, b1, w2, b2):
    """Pure-JAX reference matching the kernel's mixed precision."""
    h = jnp.tanh(jnp.dot(x.astype(jnp.bfloat16), w1,
                         preferred_element_type=jnp.float32) + b1)
    return jnp.dot(h.astype(jnp.bfloat16), w2,
                   preferred_element_type=jnp.float32) + b2


if __name__ == "__main__":
    key = jax.random.PRNGKey(0)
    kx, kp = jax.random.split(key)

    batch = 2
    # State = 400 binary structure pixels + agent (x, y) coordinates (Player.step).
    pixels = (jax.random.uniform(kx, (batch, 400)) > 0.5).astype(jnp.float32)
    coords = jnp.tile(jnp.array([[3.0, 7.0]], dtype=jnp.float32), (batch, 1))
    x = jnp.concatenate([pixels, coords], axis=1)          # [2, 402] f32

    w1, b1, w2, b2 = init_params(kp)

    out = neural_network_forward(x, w1, b1, w2, b2)
    out = jax.block_until_ready(out)
    assert out.shape == (batch, NUMBER_OF_OUTPUTS)
    assert out.dtype == jnp.bfloat16
    out_f32 = out.astype(jnp.float32)
    assert bool(jnp.all(jnp.isfinite(out_f32)))

    # Reference with the kernel's mixed precision (bf16 operands, f32 accum).
    ref_mixed = _ref_forward(x, w1, b1, w2, b2)
    assert jnp.allclose(out_f32, ref_mixed, atol=2e-2, rtol=2e-2)

    # Looser sanity check against a full-f32 forward (bf16 weights upcast).
    ref_f32 = jnp.tanh(x @ w1.astype(jnp.float32) + b1) @ w2.astype(jnp.float32) + b2
    assert jnp.allclose(out_f32, ref_f32, atol=5e-2, rtol=5e-2)

    # Exercise the multi-step grid + masked ragged edge block (B=40, tb=16):
    # 3 grid steps, last block covers rows 32..47 with rows 40..47 masked off.
    batch2 = 40
    x2 = jax.random.uniform(kx, (batch2, NUMBER_OF_INPUTS), jnp.float32)
    out2 = jax.block_until_ready(
        neural_network_forward(x2, w1, b1, w2, b2, block_b=16))
    assert out2.shape == (batch2, NUMBER_OF_OUTPUTS)
    ref2 = _ref_forward(x2, w1, b1, w2, b2)
    assert jnp.allclose(out2.astype(jnp.float32), ref2, atol=2e-2, rtol=2e-2)

    print("KERNEL_OK")
</pallas_src>

<mosaic_0001>
module attributes {stable_mosaic.version = 11 : i64} {
  func.func @mlp_kernel(%arg0: i32, %arg1: memref<2x402xf32, #tpu.memory_space<vmem>>, %arg2: memref<402x64xbf16, #tpu.memory_space<vmem>>, %arg3: memref<1x64xf32, #tpu.memory_space<vmem>>, %arg4: memref<64x5xbf16, #tpu.memory_space<vmem>>, %arg5: memref<1x5xf32, #tpu.memory_space<vmem>>, %arg6: memref<2x5xbf16, #tpu.memory_space<vmem>>) attributes {dimension_semantics = [#tpu.dimension_semantics<parallel>], iteration_bounds = array<i64: 1>, scalar_prefetch = 0 : i64, scratch_operands = 0 : i64, tpu.core_type = #tpu.core_type<tc>, window_params = [{transform_indices = @transform_0, window_bounds = array<i64: 2, 402>}, {pipeline_mode = #tpu.pipeline_mode<synchronous>, transform_indices = @transform_1, window_bounds = array<i64: 402, 64>}, {pipeline_mode = #tpu.pipeline_mode<synchronous>, transform_indices = @transform_2, window_bounds = array<i64: 1, 64>}, {pipeline_mode = #tpu.pipeline_mode<synchronous>, transform_indices = @transform_3, window_bounds = array<i64: 64, 5>}, {pipeline_mode = #tpu.pipeline_mode<synchronous>, transform_indices = @transform_4, window_bounds = array<i64: 1, 5>}, {transform_indices = @transform_5, window_bounds = array<i64: 2, 5>}]} {
    %c0 = arith.constant 0 : index
    %c0_0 = arith.constant 0 : index
    %0 = vector.load %arg1[%c0, %c0_0] : memref<2x402xf32, #tpu.memory_space<vmem>>, vector<2x402xf32>
    %1 = arith.truncf %0 : vector<2x402xf32> to vector<2x402xbf16>
    %c0_1 = arith.constant 0 : index
    %c0_2 = arith.constant 0 : index
    %2 = vector.load %arg2[%c0_1, %c0_2] : memref<402x64xbf16, #tpu.memory_space<vmem>>, vector<402x64xbf16>
    %cst = arith.constant dense<0.000000e+00> : vector<2x64xf32>
    %3 = tpu.matmul %1, %2, %cst {dimension_numbers = #tpu.dot_dimension_numbers<[1], [0], [0], [1], [0, 0, 1, 1], [], []>} : vector<2x402xbf16>, vector<402x64xbf16>, vector<2x64xf32> -> vector<2x64xf32>
    %c0_3 = arith.constant 0 : index
    %c0_4 = arith.constant 0 : index
    %4 = vector.load %arg3[%c0_3, %c0_4] : memref<1x64xf32, #tpu.memory_space<vmem>>, vector<1x64xf32>
    %5 = vector.broadcast %4 : vector<1x64xf32> to vector<2x64xf32>
    %6 = arith.addf %3, %5 : vector<2x64xf32>
    %7 = math.tanh %6 : vector<2x64xf32>
    %8 = arith.truncf %7 : vector<2x64xf32> to vector<2x64xbf16>
    %c0_5 = arith.constant 0 : index
    %c0_6 = arith.constant 0 : index
    %9 = vector.load %arg4[%c0_5, %c0_6] : memref<64x5xbf16, #tpu.memory_space<vmem>>, vector<64x5xbf16>
    %cst_7 = arith.constant dense<0.000000e+00> : vector<2x5xf32>
    %10 = tpu.matmul %8, %9, %cst_7 {dimension_numbers = #tpu.dot_dimension_numbers<[1], [0], [0], [1], [0, 0, 1, 1], [], []>} : vector<2x64xbf16>, vector<64x5xbf16>, vector<2x5xf32> -> vector<2x5xf32>
    %c0_8 = arith.constant 0 : index
    %c0_9 = arith.constant 0 : index
    %11 = vector.load %arg5[%c0_8, %c0_9] : memref<1x5xf32, #tpu.memory_space<vmem>>, vector<1x5xf32>
    %12 = vector.broadcast %11 : vector<1x5xf32> to vector<2x5xf32>
    %13 = arith.addf %10, %12 : vector<2x5xf32>
    %14 = arith.truncf %13 : vector<2x5xf32> to vector<2x5xbf16>
    %c0_10 = arith.constant 0 : index
    %c0_11 = arith.constant 0 : index
    %15 = vector.load %arg6[%c0_10, %c0_11] : memref<2x5xbf16, #tpu.memory_space<vmem>>, vector<2x5xbf16>
    tpu.vector_store %arg6[%c0_10, %c0_11], %14 {strides = array<i32>} : memref<2x5xbf16, #tpu.memory_space<vmem>>, vector<2x5xbf16>,
    return
  }
  func.func @transform_0(%arg0: i32) -> (i32, i32) {
    %c0_i32 = arith.constant 0 : i32
    %c0_i32_0 = arith.constant 0 : i32
    return %arg0, %c0_i32 : i32, i32
  }
  func.func @transform_1(%arg0: i32) -> (i32, i32) {
    %c0_i32 = arith.constant 0 : i32
    %c0_i32_0 = arith.constant 0 : i32
    %c0_i32_1 = arith.constant 0 : i32
    return %c0_i32, %c0_i32_0 : i32, i32
  }
  func.func @transform_2(%arg0: i32) -> (i32, i32) {
    %c0_i32 = arith.constant 0 : i32
    %c0_i32_0 = arith.constant 0 : i32
    %c0_i32_1 = arith.constant 0 : i32
    return %c0_i32, %c0_i32_0 : i32, i32
  }
  func.func @transform_3(%arg0: i32) -> (i32, i32) {
    %c0_i32 = arith.constant 0 : i32
    %c0_i32_0 = arith.constant 0 : i32
    %c0_i32_1 = arith.constant 0 : i32
    return %c0_i32, %c0_i32_0 : i32, i32
  }
  func.func @transform_4(%arg0: i32) -> (i32, i32) {
    %c0_i32 = arith.constant 0 : i32
    %c0_i32_0 = arith.constant 0 : i32
    %c0_i32_1 = arith.constant 0 : i32
    return %c0_i32, %c0_i32_0 : i32, i32
  }
  func.func @transform_5(%arg0: i32) -> (i32, i32) {
    %c0_i32 = arith.constant 0 : i32
    %c0_i32_0 = arith.constant 0 : i32
    return %arg0, %c0_i32 : i32, i32
  }
}

</mosaic_0001>

<llo_original>
// kernel: neural_network_forward.1
$region0: #{neural_network_forward.1}
  #allocation0 [shape = 'u32[]', space=smem, size = 0x4, offset = 0x4, fixed_abs, tag = 'smem constant byte address 0x4 - core index']
  #allocation1 [shape = 'u32[144,128]{1,0:T(1,128)}', space=vmem, size = 0x12000, scoped, tag = 'internal scratch']
  %s0 = inlined_call_operand.vmem [shape: f32[2,402], index: 0, kind: input, shape index: {}]
  %s1 = inlined_call_operand.vmem [shape: bf16[402,64], index: 1, kind: input, shape index: {}]
  %s2 = inlined_call_operand.vmem [shape: f32[1,64], index: 2, kind: input, shape index: {}]
  %s3 = inlined_call_operand.vmem [shape: bf16[64,5], index: 3, kind: input, shape index: {}]
  %s4 = inlined_call_operand.vmem [shape: f32[1,5], index: 4, kind: input, shape index: {}]
  %s5 = inlined_call_operand.hbm [shape: bf16[2,5], index: 5, kind: output, shape index: {}]
  %s6 = sld [smem:[#allocation0]]
  $region30: #{neural_network_forward.1} parent=0
    _
  %s8 = ssub.s32 1, %s6
  %s9 = scalar_select 0, %s8, %s6
  $region1: #{neural_network_forward.1} parent=0
    #allocation2 [shape = 'u8[512]{0}', space=vmem, size = 0x400, scoped, tag = 'output window, operand 0, single buffered']
    #allocation3 [shape = 's32[1]{0}', space=sflag, size = 0x4, scoped, tag = 'scoped memory for neural_network_forward.1']
    %10 = vsyncpa [#allocation3], 0
    // Predicated region
    $region2: #{neural_network_forward.1} parent=1 // pred_check
      _
    $region3: #{neural_network_forward.1} parent=1 // pred_check_branch
      %12 = sbr.rel (0) target = $region5
    $region4: #{neural_network_forward.1} parent=1 // pred_region
      _
    $region5: #{neural_network_forward.1} parent=1 // pred_fallthru
      _
    // Predicated region
    $region6: #{neural_network_forward.1} parent=1 // pred_check
      _
    $region7: #{neural_network_forward.1} parent=1 // pred_check_branch
      %14 = sbr.rel (0) target = $region9
    $region8: #{neural_network_forward.1} parent=1 // pred_region
      _
    $region9: #{neural_network_forward.1} parent=1 // pred_fallthru
      _
    // Predicated region
    $region10: #{neural_network_forward.1} parent=1 // pred_check
      _
    $region11: #{neural_network_forward.1} parent=1 // pred_check_branch
      %16 = sbr.rel (0) target = $region13
    $region12: #{neural_network_forward.1} parent=1 // pred_region
      _
    $region13: #{neural_network_forward.1} parent=1 // pred_fallthru
      _
    // Predicated region
    $region14: #{neural_network_forward.1} parent=1 // pred_check
      _
    $region15: #{neural_network_forward.1} parent=1 // pred_check_branch
      %18 = sbr.rel (0) target = $region17
    $region16: #{neural_network_forward.1} parent=1 // pred_region
      _
    $region17: #{neural_network_forward.1} parent=1 // pred_fallthru
      _
    // Predicated region
    $region18: #{neural_network_forward.1} parent=1 // pred_check
      _
    $region19: #{neural_network_forward.1} parent=1 // pred_check_branch
      %20 = sbr.rel (0) target = $region21
    $region20: #{neural_network_forward.1} parent=1 // pred_region
      _
    $region21: #{neural_network_forward.1} parent=1 // pred_fallthru
      _
    %v22 = vld [vmem:[%s0] sm:$0xff]
    %v24 = vcombine.high %v22, %v22
    %v26 = vunpack.c.l.s4 1983009808
    %v27 = vunpack.c.0.s8 %v26
    %v28 = vlaneseq
    %v29 = vshrl.u32 %v28, 7
    %v30 = vsub.s32 %v27, %v29
    %v31 = vrot.slane %v22, %v30
    %v33 = vunpack.c.l.s4 1983009808
    %v34 = vunpack.c.0.s8 %v33
    %v35 = vlaneseq
    %v36 = vshrl.u32 %v35, 7
    %v37 = vsub.s32 %v34, %v36
    %v38 = vrot.slane %v24, %v37
    %v39 = vcombine.high %v31, %v31
    %v40 = vcombine.high %v38, %v38
    %v45 = vpack.c.bf16 %v31, %v31
    %v46 = vpack.c.bf16 %v39, %v39
    %v47 = vpack.c.bf16 %v38, %v38
    %v48 = vpack.c.bf16 %v40, %v40
    %v49 = vld [vmem:[%s1] sm:$0xf]
    %v50 = vld [vmem:[%s1 + $0x4] sm:$0xf]
    %v51 = vld [vmem:[%s1 + $0x8] sm:$0xf]
    %v52 = vld [vmem:[%s1 + $0xc] sm:$0xf]
    %v53 = vld [vmem:[%s1 + $0x10] sm:$0xf]
    %v54 = vld [vmem:[%s1 + $0x14] sm:$0xf]
    %v55 = vld [vmem:[%s1 + $0x18] sm:$0xf]
    %v56 = vld [vmem:[%s1 + $0x1c] sm:$0xf]
    %v57 = vld [vmem:[%s1 + $0x20] sm:$0xf]
    %v58 = vld [vmem:[%s1 + $0x24] sm:$0xf]
    %v59 = vld [vmem:[%s1 + $0x28] sm:$0xf]
    %v60 = vld [vmem:[%s1 + $0x2c] sm:$0xf]
    %v61 = vld [vmem:[%s1 + $0x30] sm:$0xf]
    %v62 = vld [vmem:[%s1 + $0x34] sm:$0xf]
    %v63 = vld [vmem:[%s1 + $0x38] sm:$0xf]
    %v64 = vld [vmem:[%s1 + $0x3c] sm:$0xf]
    %v65 = vld [vmem:[%s1 + $0x40] sm:$0xf]
    %v66 = vld [vmem:[%s1 + $0x44] sm:$0xf]
    %v67 = vld [vmem:[%s1 + $0x48] sm:$0xf]
    %v68 = vld [vmem:[%s1 + $0x4c] sm:$0xf]
    %v69 = vld [vmem:[%s1 + $0x50] sm:$0xf]
    %v70 = vld [vmem:[%s1 + $0x54] sm:$0xf]
    %v71 = vld [vmem:[%s1 + $0x58] sm:$0xf]
    %v72 = vld [vmem:[%s1 + $0x5c] sm:$0xf]
    %v73 = vld [vmem:[%s1 + $0x60] sm:$0xf]
    %v74 = vld [vmem:[%s1 + $0x64] sm:$0xf]
    %v75 = vld [vmem:[%s1 + $0x68] sm:$0xf]
    %v76 = vld [vmem:[%s1 + $0x6c] sm:$0xf]
    %v77 = vld [vmem:[%s1 + $0x70] sm:$0xf]
    %v78 = vld [vmem:[%s1 + $0x74] sm:$0xf]
    %v79 = vld [vmem:[%s1 + $0x78] sm:$0xf]
    %v80 = vld [vmem:[%s1 + $0x7c] sm:$0xf]
    %v81 = vld [vmem:[%s1 + $0x80] sm:$0xf]
    %v82 = vld [vmem:[%s1 + $0x84] sm:$0xf]
    %v83 = vld [vmem:[%s1 + $0x88] sm:$0xf]
    %v84 = vld [vmem:[%s1 + $0x8c] sm:$0xf]
    %v85 = vld [vmem:[%s1 + $0x90] sm:$0xf]
    %v86 = vld [vmem:[%s1 + $0x94] sm:$0xf]
    %v87 = vld [vmem:[%s1 + $0x98] sm:$0xf]
    %v88 = vld [vmem:[%s1 + $0x9c] sm:$0xf]
    %v89 = vld [vmem:[%s1 + $0xa0] sm:$0xf]
    %v90 = vld [vmem:[%s1 + $0xa4] sm:$0xf]
    %v91 = vld [vmem:[%s1 + $0xa8] sm:$0xf]
    %v92 = vld [vmem:[%s1 + $0xac] sm:$0xf]
    %v93 = vld [vmem:[%s1 + $0xb0] sm:$0xf]
    %v94 = vld [vmem:[%s1 + $0xb4] sm:$0xf]
    %v95 = vld [vmem:[%s1 + $0xb8] sm:$0xf]
    %v96 = vld [vmem:[%s1 + $0xbc] sm:$0xf]
    %v97 = vld [vmem:[%s1 + $0xc0] sm:$0xf]
    %v98 = vld [vmem:[%s1 + $0xc4] sm:$0xf]
    %v99 = vld [vmem:[%s1 + $0xc8] sm:$0x1]
    %v100 = vld [vmem:[%s2] sm:$0x1]
    %v102 = vlaneseq
    %v103 = vshrl.u32 %v102, 7
    %v104 = vsub.s32 0, %v103
    %v105 = vrot.slane %v100, %v104
    %v158 = vunpack.c.l.b16 %v49
    %v159 = vunpack.c.l.b16 %v50
    %v160 = vunpack.c.l.b16 %v51
    %v161 = vunpack.c.l.b16 %v52
    %v162 = vunpack.c.l.b16 %v53
    %v163 = vunpack.c.l.b16 %v54
    %v164 = vunpack.c.l.b16 %v55
    %v165 = vunpack.c.l.b16 %v56
    %v166 = vunpack.c.l.b16 %v57
    %v167 = vunpack.c.l.b16 %v58
    %v168 = vunpack.c.l.b16 %v59
    %v169 = vunpack.c.l.b16 %v60
    %v170 = vunpack.c.l.b16 %v61
    %v171 = vunpack.c.l.b16 %v62
    %v172 = vunpack.c.l.b16 %v63
    %v173 = vunpack.c.l.b16 %v64
    %v174 = vunpack.c.l.b16 %v65
    %v175 = vunpack.c.l.b16 %v66
    %v176 = vunpack.c.l.b16 %v67
    %v177 = vunpack.c.l.b16 %v68
    %v178 = vunpack.c.l.b16 %v69
    %v179 = vunpack.c.l.b16 %v70
    %v180 = vunpack.c.l.b16 %v71
    %v181 = vunpack.c.l.b16 %v72
    %v182 = vunpack.c.l.b16 %v73
    %v183 = vunpack.c.l.b16 %v74
    %v184 = vunpack.c.l.b16 %v75
    %v185 = vunpack.c.l.b16 %v76
    %v186 = vunpack.c.l.b16 %v77
    %v187 = vunpack.c.l.b16 %v78
    %v188 = vunpack.c.l.b16 %v79
    %v189 = vunpack.c.l.b16 %v80
    %v190 = vunpack.c.l.b16 %v81
    %v191 = vunpack.c.l.b16 %v82
    %v192 = vunpack.c.l.b16 %v83
    %v193 = vunpack.c.l.b16 %v84
    %v194 = vunpack.c.l.b16 %v85
    %v195 = vunpack.c.l.b16 %v86
    %v196 = vunpack.c.l.b16 %v87
    %v197 = vunpack.c.l.b16 %v88
    %v198 = vunpack.c.l.b16 %v89
    %v199 = vunpack.c.l.b16 %v90
    %v200 = vunpack.c.l.b16 %v91
    %v201 = vunpack.c.l.b16 %v92
    %v202 = vunpack.c.l.b16 %v93
    %v203 = vunpack.c.l.b16 %v94
    %v204 = vunpack.c.l.b16 %v95
    %v205 = vunpack.c.l.b16 %v96
    %v206 = vunpack.c.l.b16 %v97
    %v207 = vunpack.c.l.b16 %v98
    %v208 = vunpack.c.l.b16 %v99
    %v209 = vpack.c.b16 %v159, %v158
    %v210 = vpack.c.b16 %v161, %v160
    %v211 = vpack.c.b16 %v163, %v162
    %v212 = vpack.c.b16 %v165, %v164
    %v213 = vpack.c.b16 %v167, %v166
    %v214 = vpack.c.b16 %v169, %v168
    %v215 = vpack.c.b16 %v171, %v170
    %v216 = vpack.c.b16 %v173, %v172
    %v217 = vpack.c.b16 %v175, %v174
    %v218 = vpack.c.b16 %v177, %v176
    %v219 = vpack.c.b16 %v179, %v178
    %v220 = vpack.c.b16 %v181, %v180
    %v221 = vpack.c.b16 %v183, %v182
    %v222 = vpack.c.b16 %v185, %v184
    %v223 = vpack.c.b16 %v187, %v186
    %v224 = vpack.c.b16 %v189, %v188
    %v225 = vpack.c.b16 %v191, %v190
    %v226 = vpack.c.b16 %v193, %v192
    %v227 = vpack.c.b16 %v195, %v194
    %v228 = vpack.c.b16 %v197, %v196
    %v229 = vpack.c.b16 %v199, %v198
    %v230 = vpack.c.b16 %v201, %v200
    %v231 = vpack.c.b16 %v203, %v202
    %v232 = vpack.c.b16 %v205, %v204
    %v233 = vpack.c.b16 %v207, %v206
    %v234 = vpack.c.b16 %v208, %v208
    %vm260 = vcmask 146432
    %v262 = vsel %vm260, %v48, 0
    %vm264 = vcmask 1040384
    %v266 = vsel %vm264, %v234, 0
    %268 = vmatprep.subr.bf16.mxu0 0
    %269 = vmatpush1.bf16.msra.mxu0 %v209
    %270 = vmatprep.subr.bf16.mxu0 0
    %271 = vmatpush1.bf16.msra.mxu0 %v210
    %272 = vmatprep.subr.bf16.mxu0 0
    %273 = vmatpush1.bf16.msra.mxu0 %v211
    %274 = vmatprep.subr.bf16.mxu0 0
    %275 = vmatpush1.bf16.msra.mxu0 %v212
    %276 = vmatprep.subr.bf16.mxu0 0
    %277 = vmatpush1.bf16.msra.mxu0 %v213
    %278 = vmatprep.subr.bf16.mxu0 0
    %279 = vmatpush1.bf16.msra.mxu0 %v214
    %280 = vmatprep.subr.bf16.mxu0 0
    %281 = vmatpush1.bf16.msra.mxu0 %v215
    %282 = vmatprep.subr.bf16.mxu0 0
    %283 = vmatpush1.bf16.msra.mxu0 %v216
    %284 = vmatprep.subr.bf16.mxu0 0
    %285 = vmatpush1.bf16.msra.mxu0 %v217
    %286 = vmatprep.subr.bf16.mxu0 0
    %287 = vmatpush1.bf16.msra.mxu0 %v218
    %288 = vmatprep.subr.bf16.mxu0 0
    %289 = vmatpush1.bf16.msra.mxu0 %v219
    %290 = vmatprep.subr.bf16.mxu0 0
    %291 = vmatpush1.bf16.msra.mxu0 %v220
    %292 = vmatprep.subr.bf16.mxu0 0
    %293 = vmatpush1.bf16.msra.mxu0 %v221
    %294 = vmatprep.subr.bf16.mxu0 0
    %295 = vmatpush1.bf16.msra.mxu0 %v222
    %296 = vmatprep.subr.bf16.mxu0 0
    %297 = vmatpush1.bf16.msra.mxu0 %v223
    %298 = vmatprep.subr.bf16.mxu0 0
    %299 = vmatpush1.bf16.msra.mxu0 %v224
    %300 = vmatprep.mubr.bf16.mxu0 %v46
    %301 = vmatmul.mubr.bf16.gmra.mrb[0].mxu0 %v45
    %v302 = vpop.f32.mrb[0].mxu0
    %v303 = vadd.f32 %v105, %v302
    %v304 = vpop.f32.mrb[0].mxu0
    %v305 = vpop.f32.mrb[0].mxu0
    %v306 = vpop.f32.mrb[0].mxu0
    %307 = vdwg.mxu0
    %308 = vmatprep.subr.bf16.mxu0 0
    %309 = vmatpush1.bf16.msra.mxu0 %v225
    %310 = vmatprep.subr.bf16.mxu0 0
    %311 = vmatpush1.bf16.msra.mxu0 %v226
    %312 = vmatprep.subr.bf16.mxu0 0
    %313 = vmatpush1.bf16.msra.mxu0 %v227
    %314 = vmatprep.subr.bf16.mxu0 0
    %315 = vmatpush1.bf16.msra.mxu0 %v228
    %316 = vmatprep.subr.bf16.mxu0 0
    %317 = vmatpush1.bf16.msra.mxu0 %v229
    %318 = vmatprep.subr.bf16.mxu0 0
    %319 = vmatpush1.bf16.msra.mxu0 %v230
    %320 = vmatprep.subr.bf16.mxu0 0
    %321 = vmatpush1.bf16.msra.mxu0 %v231
    %322 = vmatprep.subr.bf16.mxu0 0
    %323 = vmatpush1.bf16.msra.mxu0 %v232
    %324 = vmatprep.subr.bf16.mxu0 0
    %325 = vmatpush1.bf16.msra.mxu0 %v233
    %326 = vmatprep.subr.bf16.mxu0 0
    %327 = vmatpush1.bf16.msra.mxu0 %v266
    %328 = vmatprep.subr.bf16.mxu0 0
    %329 = vmatpush1.bf16.msra.mxu0 0
    %330 = vmatprep.subr.bf16.mxu0 0
    %331 = vmatpush1.bf16.msra.mxu0 0
    %332 = vmatprep.subr.bf16.mxu0 0
    %333 = vmatpush1.bf16.msra.mxu0 0
    %334 = vmatprep.subr.bf16.mxu0 0
    %335 = vmatpush1.bf16.msra.mxu0 0
    %336 = vmatprep.subr.bf16.mxu0 0
    %337 = vmatpush1.bf16.msra.mxu0 0
    %338 = vmatprep.subr.bf16.mxu0 0
    %339 = vmatpush1.bf16.msra.mxu0 0
    %340 = vmatprep.mubr.bf16.mxu0 %v262
    %341 = vmatmul.mubr.bf16.gmra.mrb[0].mxu0 %v47
    %v342 = vpop.f32.mrb[0].mxu0
    %v343 = vadd.f32 %v303, %v342
    %v344 = vpop.f32.mrb[0].mxu0
    %v345 = vpop.f32.mrb[0].mxu0
    %v346 = vpop.f32.mrb[0].mxu0
    %347 = vdwg.mxu0
    %v348 = vtanh.pop %v343
    %v349 = vpack.c.bf16 %v348, %v348
    %v350 = vld [vmem:[%s3] sm:$0xf]
    %v351 = vld [vmem:[%s3 + $0x4] sm:$0xf]
    %v352 = vld [vmem:[%s3 + $0x8] sm:$0xf]
    %v353 = vld [vmem:[%s3 + $0xc] sm:$0xf]
    %v354 = vld [vmem:[%s3 + $0x10] sm:$0xf]
    %v355 = vld [vmem:[%s3 + $0x14] sm:$0xf]
    %v356 = vld [vmem:[%s3 + $0x18] sm:$0xf]
    %v357 = vld [vmem:[%s3 + $0x1c] sm:$0xf]
    %v358 = vld [vmem:[%s4] sm:$0x1]
    %v360 = vlaneseq
    %v361 = vshrl.u32 %v360, 7
    %v362 = vsub.s32 0, %v361
    %v363 = vrot.slane %v358, %v362
    %v373 = vunpack.c.l.b16 %v350
    %v374 = vunpack.c.l.b16 %v351
    %v375 = vunpack.c.l.b16 %v352
    %v376 = vunpack.c.l.b16 %v353
    %v377 = vunpack.c.l.b16 %v354
    %v378 = vunpack.c.l.b16 %v355
    %v379 = vunpack.c.l.b16 %v356
    %v380 = vunpack.c.l.b16 %v357
    %v381 = vpack.c.b16 %v374, %v373
    %v382 = vpack.c.b16 %v376, %v375
    %v383 = vpack.c.b16 %v378, %v377
    %v384 = vpack.c.b16 %v380, %v379
    %vm389 = vcmask 523264
    %v391 = vsel %vm389, %v349, 0
    %393 = vmatprep.subr.bf16.mxu0 0
    %394 = vmatpush1.bf16.msra.mxu0 %v381
    %395 = vmatprep.subr.bf16.mxu0 0
    %396 = vmatpush1.bf16.msra.mxu0 %v382
    %397 = vmatprep.subr.bf16.mxu0 0
    %398 = vmatpush1.bf16.msra.mxu0 %v383
    %399 = vmatprep.subr.bf16.mxu0 0
    %400 = vmatpush1.bf16.msra.mxu0 %v384
    %401 = vmatprep.subr.bf16.mxu0 0
    %402 = vmatpush1.bf16.msra.mxu0 0
    %403 = vmatprep.subr.bf16.mxu0 0
    %404 = vmatpush1.bf16.msra.mxu0 0
    %405 = vmatprep.subr.bf16.mxu0 0
    %406 = vmatpush1.bf16.msra.mxu0 0
    %407 = vmatprep.subr.bf16.mxu0 0
    %408 = vmatpush1.bf16.msra.mxu0 0
    %409 = vmatprep.subr.bf16.mxu0 0
    %410 = vmatpush1.bf16.msra.mxu0 0
    %411 = vmatprep.subr.bf16.mxu0 0
    %412 = vmatpush1.bf16.msra.mxu0 0
    %413 = vmatprep.subr.bf16.mxu0 0
    %414 = vmatpush1.bf16.msra.mxu0 0
    %415 = vmatprep.subr.bf16.mxu0 0
    %416 = vmatpush1.bf16.msra.mxu0 0
    %417 = vmatprep.subr.bf16.mxu0 0
    %418 = vmatpush1.bf16.msra.mxu0 0
    %419 = vmatprep.subr.bf16.mxu0 0
    %420 = vmatpush1.bf16.msra.mxu0 0
    %421 = vmatprep.subr.bf16.mxu0 0
    %422 = vmatpush1.bf16.msra.mxu0 0
    %423 = vmatprep.subr.bf16.mxu0 0
    %424 = vmatpush1.bf16.msra.mxu0 0
    %425 = vmatprep.mubr.bf16.mxu0 0
    %426 = vmatmul.mubr.bf16.gmra.mrb[0].mxu0 %v391
    %v427 = vpop.f32.mrb[0].mxu0
    %v428 = vadd.f32 %v363, %v427
    %v429 = vpop.f32.mrb[0].mxu0
    %v430 = vpop.f32.mrb[0].mxu0
    %v431 = vpop.f32.mrb[0].mxu0
    %432 = vdwg.mxu0
    %v433 = vpack.c.bf16 %v428, %v428
    %vm434 = vcmask 32768
    %435 = vst.msk [vmem:[#allocation2] sm:$0x1] %vm434, %v433
    // Predicated region
    $region22: #{neural_network_forward.1} parent=1 // pred_check
      _
    $region23: #{neural_network_forward.1} parent=1 // pred_check_branch
      %437 = sbr.rel (0) target = $region25
    $region24: #{neural_network_forward.1} parent=1 // pred_region
      %s439 = ssub.s32 16, 16
      %440 = vsyncadd [#allocation3], %s439
      %s442 = sshll.u32 [#allocation2], 4
      %s443 = int_to_ptr.vmem [resolvable:$true] %s442
      %445 = dma.vmem_to_hbm [thread:$0]  %s443, 16, %s5, [#allocation3]
    $region25: #{neural_network_forward.1} parent=1 // pred_fallthru
      _
    // Predicated region
    $region26: #{neural_network_forward.1} parent=1 // pred_check
      _
    $region27: #{neural_network_forward.1} parent=1 // pred_check_branch
      %447 = sbr.rel (0) target = $region29
    $region28: #{neural_network_forward.1} parent=1 // pred_region
      %448 = dma.done [#allocation3], 16
    $region29: #{neural_network_forward.1} parent=1 // pred_fallthru
      _
    %449 = vsyncpa [#allocation3], 1

</llo_original>
